<compile_context>
chip_gen: v7x
topology: tpu7x:2x2x1
jax: 0.10.0
libtpu: 0.0.40
codegen_flags: <defaults>
</compile_context>

<pallas_src>
import functools

import jax
import jax.numpy as jnp
from jax.experimental import pallas as pl
from jax.experimental.pallas import tpu as pltpu


_TM_MAX = 1024           # max rows per tile; sweep per generation (v6e can go higher)
_VMEM_BUDGET = 48 << 20  # conservative cross-gen tile budget (v7x physical VMEM = 64 MiB)


def _round_up(x, m):
    return ((x + m - 1) // m) * m


def _vmem_bytes(tm, D, K, x_item, c_item, training):
    """Estimated VMEM footprint of one pipelined step (padded to (8,128) tiles)."""
    dpad = _round_up(D, 128)
    kpad = _round_up(K, 128)
    b = 2 * tm * dpad * x_item                 # x tile, double-buffered
    b += 2 * _round_up(K, 8) * dpad * c_item   # centroids (constant block index)
    b += 2 * 8 * kpad * 4                      # c_sq (1, K)
    b += 2 * tm * kpad * 4                     # output tile, double-buffered
    if training:
        b += 2 * tm * kpad * 4                 # gumbel noise tile
    return b


def _pick_tile_and_vmem(N, D, K, x_item, c_item, training):
    # Aim for >= 4 grid steps so v7x's second TensorCore gets work and every
    # gen overlaps the DMA of tile i+1 with the compute of tile i.
    tm = min(_TM_MAX, max(8, _round_up(pl.cdiv(N, 4), 8)))
    if tm > N:
        tm = N  # full-extent block is always legal (tiny-N case)
    while tm > 8 and _vmem_bytes(tm, D, K, x_item, c_item, training) > _VMEM_BUDGET:
        tm = max(8, _round_up(tm // 2, 8))
    need = _vmem_bytes(tm, D, K, x_item, c_item, training)
    vmem_limit = min(64 << 20, max(16 << 20, int(need * 1.25)))
    return tm, vmem_limit


def _one_hot_of_argmax(vals):
    """Row-wise one-hot at argmax, smallest-index tie-break (matches torch)."""
    n, k = vals.shape
    col = jax.lax.broadcasted_iota(jnp.int32, (n, k), 1)
    is_max = vals == jnp.max(vals, axis=-1, keepdims=True)
    argidx = jnp.min(jnp.where(is_max, col, k), axis=-1, keepdims=True)
    return jnp.where(col == argidx, 1.0, 0.0)


def _cross_dot(x, c):
    """x @ c.T on the MXU in the operands' native dtype, f32 accumulate."""
    return jax.lax.dot_general(
        x, c, (((1,), (1,)), ((), ())), preferred_element_type=jnp.float32
    )  # (TM, K) f32


def _assign_eval_kernel(x_ref, c_ref, csq_ref, out_ref):
    # argmax_j ||x - c_j|| == argmax_j (||c_j||^2 - 2 x.c_j): no sqrt, no ||x||^2.
    xc = _cross_dot(x_ref[...], c_ref[...])
    proxy = csq_ref[...] - 2.0 * xc
    out_ref[...] = _one_hot_of_argmax(proxy).astype(out_ref.dtype)


def _assign_train_kernel(x_ref, c_ref, csq_ref, g_ref, out_ref, *, tau, hard):
    x = x_ref[...]                              # native dtype straight to the MXU
    xc = _cross_dot(x, c_ref[...])
    xf = x.astype(jnp.float32)                  # f32 only for the elementwise norm term
    x_sq = jnp.sum(xf * xf, axis=-1, keepdims=True)
    scores = jnp.sqrt(jnp.maximum(x_sq + csq_ref[...] - 2.0 * xc, 0.0))
    y = scores + g_ref[...]                     # Gumbel noise streamed in (f32)

    if hard:
        # softmax(y/tau) is row-monotone for tau > 0: argmax unchanged, so the
        # straight-through forward never needs the softmax.
        out_ref[...] = _one_hot_of_argmax(y).astype(out_ref.dtype)
    else:
        y = y * (1.0 / tau)
        y = y - jnp.max(y, axis=-1, keepdims=True)
        e = jnp.exp(y)
        denom = jnp.sum(e, axis=-1, keepdims=True)
        # One divide per row, broadcast-multiplied (portable; pl.reciprocal
        # approx=True is a further EUP micro-opt if the VALU slot shows exposed).
        out_ref[...] = (e * (1.0 / denom)).astype(out_ref.dtype)


def assign_forward(seq, community_embed, msk=None, *, training=False, hard=False,
                   tau=1.0, rng_seed=0):
    """JAX/Pallas equivalent of Assign.forward(seq, msk, training)."""
    if msk is not None:
        # TODO(synk): masked branch uses undefined `centroids` in the reference.
        raise NotImplementedError(
            "masked branch references undefined `centroids` in the reference module")

    # robust "squeeze to (N, D)" (avoids torch.squeeze's N==1 pitfall)
    x = seq.reshape(-1, seq.shape[-1])
    N, D = x.shape
    K = community_embed.shape[0]

    # Loop-invariant centroid work hoisted to XLA (runs once, not once per tile).
    c_sq = jnp.sum(jnp.square(community_embed.astype(jnp.float32)),
                   axis=-1, keepdims=True).T                     # (1, K) f32

    tm, vmem_limit = _pick_tile_and_vmem(
        N, D, K, x.dtype.itemsize, community_embed.dtype.itemsize, training)
    grid = (pl.cdiv(N, tm),)

    out_shape = jax.ShapeDtypeStruct((N, K), jnp.float32)
    flops = 2 * N * D * K + 8 * N * K
    transcendentals = (N * K * (1 if hard else 2)) if training else 0  # sqrt (+ exp)
    bytes_accessed = (N * D * x.dtype.itemsize
                      + K * D * community_embed.dtype.itemsize
                      + K * 4 + N * K * 4
                      + (N * K * 4 if training else 0))
    cost = pl.CostEstimate(flops=flops, transcendentals=transcendentals,
                           bytes_accessed=bytes_accessed)
    cparams = pltpu.CompilerParams(dimension_semantics=("parallel",),
                                   vmem_limit_bytes=vmem_limit)

    x_spec = pl.BlockSpec((tm, D), lambda i: (i, 0))
    c_spec = pl.BlockSpec((K, D), lambda i: (0, 0))      # constant index: fetched once
    csq_spec = pl.BlockSpec((1, K), lambda i: (0, 0))    # constant index: fetched once
    out_spec = pl.BlockSpec((tm, K), lambda i: (i, 0))

    if training:
        # Gumbel(0,1) noise generated once by plain XLA (same distribution as
        # torch's -log(Exp(1)) in gumbel_softmax); tiny (TM, K) block per tile.
        g = jax.random.gumbel(jax.random.PRNGKey(rng_seed), (N, K), jnp.float32)
        kernel = functools.partial(_assign_train_kernel, tau=tau, hard=hard)
        assignmat = pl.pallas_call(
            kernel,
            out_shape=out_shape,
            grid=grid,
            in_specs=[x_spec, c_spec, csq_spec,
                      pl.BlockSpec((tm, K), lambda i: (i, 0))],
            out_specs=out_spec,
            compiler_params=cparams,
            cost_estimate=cost,
        )(x, community_embed, c_sq, g)
    else:
        assignmat = pl.pallas_call(
            _assign_eval_kernel,
            out_shape=out_shape,
            grid=grid,
            in_specs=[x_spec, c_spec, csq_spec],
            out_specs=out_spec,
            compiler_params=cparams,
            cost_estimate=cost,
        )(x, community_embed, c_sq)

    return community_embed, assignmat


def xavier_uniform(key, k, in_dim):
    # torch.nn.init.xavier_uniform_ on a (k, in_dim) parameter.
    bound = (6.0 / (k + in_dim)) ** 0.5
    return jax.random.uniform(key, (k, in_dim), jnp.float32, -bound, bound)


if __name__ == "__main__":
    key = jax.random.PRNGKey(0)
    k_embed, k_seq = jax.random.split(key)

    K = 4        # number of communities
    IN_DIM = 32  # embedding dim
    N = 8        # number of nodes

    community_embed = xavier_uniform(k_embed, K, IN_DIM)
    seq = jax.random.normal(k_seq, (1, N, IN_DIM), jnp.float32)

    # pure-JAX reference pieces
    x_ref_np = seq.reshape(-1, IN_DIM)
    ref_scores = jnp.linalg.norm(
        x_ref_np[:, None, :] - community_embed[None, :, :], axis=-1)   # (N, K)

    # --- eval path: one-hot at argmax of the Euclidean distance scores -------
    cent_eval, assign_eval = assign_forward(seq, community_embed, msk=None,
                                            training=False, hard=True)
    jax.block_until_ready(assign_eval)
    ref_onehot = jax.nn.one_hot(jnp.argmax(ref_scores, axis=-1), K,
                                dtype=jnp.float32)
    assert assign_eval.shape == (N, K)
    assert bool(jnp.all(assign_eval == ref_onehot))

    # --- training path, hard=True: straight-through one-hot forward ----------
    g_hard = jax.random.gumbel(jax.random.PRNGKey(42), (N, K), jnp.float32)
    _, assign_hard = assign_forward(seq, community_embed, msk=None,
                                    training=True, hard=True, rng_seed=42)
    jax.block_until_ready(assign_hard)
    ref_hard = jax.nn.one_hot(jnp.argmax(ref_scores + g_hard, axis=-1), K,
                              dtype=jnp.float32)
    assert assign_hard.shape == (N, K)
    assert bool(jnp.all(jnp.sum(assign_hard, axis=-1) == 1.0))
    assert bool(jnp.all((assign_hard == 0.0) | (assign_hard == 1.0)))
    assert bool(jnp.all(assign_hard == ref_hard))

    # --- training path, hard=False: soft gumbel-softmax probabilities --------
    g_soft = jax.random.gumbel(jax.random.PRNGKey(7), (N, K), jnp.float32)
    _, assign_soft = assign_forward(seq, community_embed, msk=None,
                                    training=True, hard=False, rng_seed=7)
    jax.block_until_ready(assign_soft)
    ref_soft = jax.nn.softmax(ref_scores + g_soft, axis=-1)
    assert assign_soft.shape == (N, K)
    assert bool(jnp.all(assign_soft >= 0.0))
    assert bool(jnp.allclose(jnp.sum(assign_soft, axis=-1), 1.0, atol=1e-3))
    assert bool(jnp.allclose(assign_soft, ref_soft, atol=5e-2, rtol=5e-2))

    print("KERNEL_OK")
</pallas_src>

<mosaic_0001>
module attributes {stable_mosaic.version = 11 : i64} {
  func.func @_assign_eval_kernel(%arg0: i32, %arg1: memref<8x32xf32, #tpu.memory_space<vmem>>, %arg2: memref<4x32xf32, #tpu.memory_space<vmem>>, %arg3: memref<1x4xf32, #tpu.memory_space<vmem>>, %arg4: memref<8x4xf32, #tpu.memory_space<vmem>>) attributes {dimension_semantics = [#tpu.dimension_semantics<parallel>], iteration_bounds = array<i64: 1>, scalar_prefetch = 0 : i64, scratch_operands = 0 : i64, tpu.core_type = #tpu.core_type<tc>, window_params = [{transform_indices = @transform_0, window_bounds = array<i64: 8, 32>}, {pipeline_mode = #tpu.pipeline_mode<synchronous>, transform_indices = @transform_1, window_bounds = array<i64: 4, 32>}, {pipeline_mode = #tpu.pipeline_mode<synchronous>, transform_indices = @transform_2, window_bounds = array<i64: 1, 4>}, {transform_indices = @transform_3, window_bounds = array<i64: 8, 4>}]} {
    %c0 = arith.constant 0 : index
    %c0_0 = arith.constant 0 : index
    %0 = vector.load %arg1[%c0, %c0_0] : memref<8x32xf32, #tpu.memory_space<vmem>>, vector<8x32xf32>
    %c0_1 = arith.constant 0 : index
    %c0_2 = arith.constant 0 : index
    %1 = vector.load %arg2[%c0_1, %c0_2] : memref<4x32xf32, #tpu.memory_space<vmem>>, vector<4x32xf32>
    %cst = arith.constant dense<0.000000e+00> : vector<8x4xf32>
    %2 = tpu.matmul %0, %1, %cst {dimension_numbers = #tpu.dot_dimension_numbers<[1], [1], [0], [0], [0, 0, 1, 0], [], []>} : vector<8x32xf32>, vector<4x32xf32>, vector<8x4xf32> -> vector<8x4xf32>
    %c0_3 = arith.constant 0 : index
    %c0_4 = arith.constant 0 : index
    %3 = vector.load %arg3[%c0_3, %c0_4] : memref<1x4xf32, #tpu.memory_space<vmem>>, vector<1x4xf32>
    %cst_5 = arith.constant 2.000000e+00 : f32
    %4 = vector.broadcast %cst_5 : f32 to vector<8x4xf32>
    %5 = arith.mulf %4, %2 : vector<8x4xf32>
    %6 = vector.broadcast %3 : vector<1x4xf32> to vector<8x4xf32>
    %7 = arith.subf %6, %5 : vector<8x4xf32>
    %8 = tpu.iota {dimensions = array<i32: 1>} : vector<8x4xi32>
    %cst_6 = arith.constant dense<0xFF800000> : vector<8xf32>
    %9 = vector.multi_reduction <maximumf>, %7, %cst_6 [1] : vector<8x4xf32> to vector<8xf32>
    %10 = vector.shape_cast %9 : vector<8xf32> to vector<8x1xf32>
    %11 = vector.broadcast %10 : vector<8x1xf32> to vector<8x4xf32>
    %12 = arith.cmpf oeq, %7, %11 : vector<8x4xf32>
    %c4_i32 = arith.constant 4 : i32
    %13 = vector.broadcast %c4_i32 : i32 to vector<8x4xi32>
    %14 = arith.select %12, %8, %13 : vector<8x4xi1>, vector<8x4xi32>
    %cst_7 = arith.constant dense<2147483647> : vector<8xi32>
    %15 = vector.multi_reduction <minsi>, %14, %cst_7 [1] : vector<8x4xi32> to vector<8xi32>
    %16 = vector.shape_cast %15 : vector<8xi32> to vector<8x1xi32>
    %17 = vector.broadcast %16 : vector<8x1xi32> to vector<8x4xi32>
    %18 = arith.cmpi eq, %8, %17 : vector<8x4xi32>
    %cst_8 = arith.constant 1.000000e+00 : f32
    %cst_9 = arith.constant 0.000000e+00 : f32
    %19 = vector.broadcast %cst_8 : f32 to vector<8x4xf32>
    %20 = vector.broadcast %cst_9 : f32 to vector<8x4xf32>
    %21 = arith.select %18, %19, %20 : vector<8x4xi1>, vector<8x4xf32>
    %c0_10 = arith.constant 0 : index
    %c0_11 = arith.constant 0 : index
    %22 = vector.load %arg4[%c0_10, %c0_11] : memref<8x4xf32, #tpu.memory_space<vmem>>, vector<8x4xf32>
    tpu.vector_store %arg4[%c0_10, %c0_11], %21 {strides = array<i32>} : memref<8x4xf32, #tpu.memory_space<vmem>>, vector<8x4xf32>,
    return
  }
  func.func @transform_0(%arg0: i32) -> (i32, i32) {
    %c0_i32 = arith.constant 0 : i32
    %c0_i32_0 = arith.constant 0 : i32
    return %arg0, %c0_i32 : i32, i32
  }
  func.func @transform_1(%arg0: i32) -> (i32, i32) {
    %c0_i32 = arith.constant 0 : i32
    %c0_i32_0 = arith.constant 0 : i32
    %c0_i32_1 = arith.constant 0 : i32
    return %c0_i32, %c0_i32_0 : i32, i32
  }
  func.func @transform_2(%arg0: i32) -> (i32, i32) {
    %c0_i32 = arith.constant 0 : i32
    %c0_i32_0 = arith.constant 0 : i32
    %c0_i32_1 = arith.constant 0 : i32
    return %c0_i32, %c0_i32_0 : i32, i32
  }
  func.func @transform_3(%arg0: i32) -> (i32, i32) {
    %c0_i32 = arith.constant 0 : i32
    %c0_i32_0 = arith.constant 0 : i32
    return %arg0, %c0_i32 : i32, i32
  }
}

</mosaic_0001>

<llo_original>
// kernel: tpu_custom_call.1
$region0: #{tpu_custom_call.1}
  #allocation0 [shape = 'u32[]', space=smem, size = 0x4, offset = 0x4, fixed_abs, tag = 'smem constant byte address 0x4 - core index']
  #allocation1 [shape = 'u32[144,128]{1,0:T(1,128)}', space=vmem, size = 0x12000, scoped, tag = 'internal scratch']
  %s0 = inlined_call_operand.hbm [shape: f32[8,32], index: 0, kind: input, shape index: {}]
  %s1 = inlined_call_operand.hbm [shape: f32[4,32], index: 1, kind: input, shape index: {}]
  %s2 = inlined_call_operand.vmem [shape: f32[1,4], index: 2, kind: input, shape index: {}]
  %s3 = inlined_call_operand.vmem [shape: f32[8,4], index: 3, kind: output, shape index: {}]
  %s4 = sld [smem:[#allocation0]]
  $region30: #{tpu_custom_call.1} parent=0
    _
  %s6 = ssub.s32 1, %s4
  %s7 = scalar_select 0, %s6, %s4
  $region1: #{tpu_custom_call.1} parent=0
    #allocation2 [shape = 'u8[4096]{0}', space=vmem, size = 0x1000, scoped, tag = 'input window, operand 0, single buffered']
    #allocation3 [shape = 's32[1]{0}', space=sflag, size = 0x4, scoped, tag = 'scoped memory for tpu_custom_call.1']
    #allocation4 [shape = 'u8[2048]{0}', space=vmem, size = 0x800, scoped, tag = 'input window, operand 1, single buffered']
    #allocation5 [shape = 's32[1]{0}', space=sflag, size = 0x4, scoped, tag = 'scoped memory for tpu_custom_call.1']
    %8 = vsyncpa [#allocation3], 0
    %9 = vsyncpa [#allocation5], 0
    // Predicated region
    $region2: #{tpu_custom_call.1} parent=1 // pred_check
      _
    $region3: #{tpu_custom_call.1} parent=1 // pred_check_branch
      %11 = sbr.rel (0) target = $region5
    $region4: #{tpu_custom_call.1} parent=1 // pred_region
      %s13 = ssub.s32 128, 128
      %14 = vsyncadd [#allocation3], %s13
      %s16 = sshll.u32 [#allocation2], 4
      %s17 = int_to_ptr.vmem [resolvable:$true] %s16
      %19 = dma.hbm_to_vmem [thread:$0]  %s0, 128, %s17, [#allocation3]
    $region5: #{tpu_custom_call.1} parent=1 // pred_fallthru
      _
    // Predicated region
    $region6: #{tpu_custom_call.1} parent=1 // pred_check
      _
    $region7: #{tpu_custom_call.1} parent=1 // pred_check_branch
      %21 = sbr.rel (0) target = $region9
    $region8: #{tpu_custom_call.1} parent=1 // pred_region
      %s23 = ssub.s32 64, 64
      %24 = vsyncadd [#allocation5], %s23
      %s26 = sshll.u32 [#allocation4], 4
      %s27 = int_to_ptr.vmem [resolvable:$true] %s26
      %29 = dma.hbm_to_vmem [thread:$0]  %s1, 64, %s27, [#allocation5]
    $region9: #{tpu_custom_call.1} parent=1 // pred_fallthru
      _
    // Predicated region
    $region10: #{tpu_custom_call.1} parent=1 // pred_check
      _
    $region11: #{tpu_custom_call.1} parent=1 // pred_check_branch
      %31 = sbr.rel (0) target = $region13
    $region12: #{tpu_custom_call.1} parent=1 // pred_region
      _
    $region13: #{tpu_custom_call.1} parent=1 // pred_fallthru
      _
    // Predicated region
    $region14: #{tpu_custom_call.1} parent=1 // pred_check
      _
    $region15: #{tpu_custom_call.1} parent=1 // pred_check_branch
      %33 = sbr.rel (0) target = $region17
    $region16: #{tpu_custom_call.1} parent=1 // pred_region
      %34 = dma.done [#allocation3], 128
    $region17: #{tpu_custom_call.1} parent=1 // pred_fallthru
      _
    // Predicated region
    $region18: #{tpu_custom_call.1} parent=1 // pred_check
      _
    $region19: #{tpu_custom_call.1} parent=1 // pred_check_branch
      %36 = sbr.rel (0) target = $region21
    $region20: #{tpu_custom_call.1} parent=1 // pred_region
      %37 = dma.done [#allocation5], 64
    $region21: #{tpu_custom_call.1} parent=1 // pred_fallthru
      _
    %v38 = vld [vmem:[#allocation2] sm:$0xff]
    %v39 = vld [vmem:[#allocation4] sm:$0xf]
    %vm40 = vcmask 261120
    %v42 = vsel %vm40, %v38, 0
    %v45 = vsel %vm40, %v39, 0
    %47 = vmatprep.subr.mxu0 0.0
    %48 = vmatpush1.xpose.msra.mxu0 %v45
    %49 = vmatprep.subr.mxu0 0.0
    %50 = vmatpush1.xpose.msra.mxu0 0.0
    %51 = vmatprep.subr.mxu0 0.0
    %52 = vmatpush1.xpose.msra.mxu0 0.0
    %53 = vmatprep.subr.mxu0 0.0
    %54 = vmatpush1.xpose.msra.mxu0 0.0
    %55 = vmatprep.subr.mxu0 0.0
    %56 = vmatpush1.xpose.msra.mxu0 0.0
    %57 = vmatprep.subr.mxu0 0.0
    %58 = vmatpush1.xpose.msra.mxu0 0.0
    %59 = vmatprep.subr.mxu0 0.0
    %60 = vmatpush1.xpose.msra.mxu0 0.0
    %61 = vmatprep.subr.mxu0 0.0
    %62 = vmatpush1.xpose.msra.mxu0 0.0
    %63 = vmatprep.subr.mxu0 0.0
    %64 = vmatpush1.xpose.msra.mxu0 0.0
    %65 = vmatprep.subr.mxu0 0.0
    %66 = vmatpush1.xpose.msra.mxu0 0.0
    %67 = vmatprep.subr.mxu0 0.0
    %68 = vmatpush1.xpose.msra.mxu0 0.0
    %69 = vmatprep.subr.mxu0 0.0
    %70 = vmatpush1.xpose.msra.mxu0 0.0
    %71 = vmatprep.subr.mxu0 0.0
    %72 = vmatpush1.xpose.msra.mxu0 0.0
    %73 = vmatprep.subr.mxu0 0.0
    %74 = vmatpush1.xpose.msra.mxu0 0.0
    %75 = vmatprep.subr.mxu0 0.0
    %76 = vmatpush1.xpose.msra.mxu0 0.0
    %77 = vmatprep.subr.mxu0 0.0
    %78 = vmatpush1.xpose.msra.mxu0 0.0
    %79 = vmatprep.subr.mxu0 0.0
    %80 = vmatpush1.xpose.msra.mxu0 0.0
    %81 = vmatprep.subr.mxu0 0.0
    %82 = vmatpush1.xpose.msra.mxu0 0.0
    %83 = vmatprep.subr.mxu0 0.0
    %84 = vmatpush1.xpose.msra.mxu0 0.0
    %85 = vmatprep.subr.mxu0 0.0
    %86 = vmatpush1.xpose.msra.mxu0 0.0
    %87 = vmatprep.subr.mxu0 0.0
    %88 = vmatpush1.xpose.msra.mxu0 0.0
    %89 = vmatprep.subr.mxu0 0.0
    %90 = vmatpush1.xpose.msra.mxu0 0.0
    %91 = vmatprep.subr.mxu0 0.0
    %92 = vmatpush1.xpose.msra.mxu0 0.0
    %93 = vmatprep.subr.mxu0 0.0
    %94 = vmatpush1.xpose.msra.mxu0 0.0
    %95 = vmatprep.subr.mxu0 0.0
    %96 = vmatpush1.xpose.msra.mxu0 0.0
    %97 = vmatprep.subr.mxu0 0.0
    %98 = vmatpush1.xpose.msra.mxu0 0.0
    %99 = vmatprep.subr.mxu0 0.0
    %100 = vmatpush1.xpose.msra.mxu0 0.0
    %101 = vmatprep.subr.mxu0 0.0
    %102 = vmatpush1.xpose.msra.mxu0 0.0
    %103 = vmatprep.subr.mxu0 0.0
    %104 = vmatpush1.xpose.msra.mxu0 0.0
    %105 = vmatprep.subr.mxu0 0.0
    %106 = vmatpush1.xpose.msra.mxu0 0.0
    %107 = vmatprep.subr.mxu0 0.0
    %108 = vmatpush1.xpose.msra.mxu0 0.0
    %109 = vmatprep.subr.mxu0 0.0
    %110 = vmatpush1.xpose.msra.mxu0 0.0
    %111 = vmatprep.mubr.f32.mxu0 0.0
    %112 = vmatmul.mubr.f32.gmra.mrb[0].mxu0 %v42
    %v113 = vpop.f32.mrb[0].mxu0
    %v114 = vadd.f32 0.0, %v113
    %v115 = vpop.f32.mrb[0].mxu0
    %116 = vdwg.mxu0
    %v117 = vld [vmem:[%s2] sm:$0x1]
    %v118 = vmul.f32 %v114, 2.0
    %v120 = vlaneseq
    %v121 = vshrl.u32 %v120, 7
    %v122 = vsub.s32 0, %v121
    %v123 = vrot.slane %v117, %v122
    %v125 = vsub.f32 %v123, %v118
    %v126 = vlaneseq
    %v127 = vand.u32 %v126, 127
    %vm128 = vcmask 31744
    %v129 = vsel %vm128, %v125, -inf
    %130 = vmax.xlane.f32.xlu0 %v129
    %v131 = vpop.xlane.xlu0 %130
    %vm132 = vcmp.eq.f32.partialorder %v125, %v131
    %v133 = vsel %vm132, %v127, 4
    %v134 = vsel %vm128, %v133, 2147483647
    %v135 = vand.u32 %v134, 65535
    %v136 = vshra.s32 %v134, 16
    %v137 = vcvt.s32.f32 %v135
    %v138 = vcvt.s32.f32 %v136
    %139 = vmin.xlane.f32.xlu0 %v138
    %v140 = vpop.xlane.xlu0 %139
    %vm141 = vcmp.eq.f32.partialorder %v138, %v140
    %v142 = vsel %vm141, %v137, inf
    %143 = vmin.xlane.f32.xlu0 %v142
    %v144 = vpop.xlane.xlu0 %143
    %v145 = vcvt.f32.s32 %v144
    %v146 = vcvt.f32.s32 %v140
    %v147 = vshll.u32 %v146, 16
    %v148 = vadd.s32 %v147, %v145
    %vm149 = vcmp.eq.s32.totalorder %v127, %v148
    %v150 = vsel %vm149, 1.0, 0.0
    %151 = vst.msk [vmem:[%s3] sm:$0xff] %vm128, %v150
    // Predicated region
    $region22: #{tpu_custom_call.1} parent=1 // pred_check
      _
    $region23: #{tpu_custom_call.1} parent=1 // pred_check_branch
      %153 = sbr.rel (0) target = $region25
    $region24: #{tpu_custom_call.1} parent=1 // pred_region
      _
    $region25: #{tpu_custom_call.1} parent=1 // pred_fallthru
      _
    // Predicated region
    $region26: #{tpu_custom_call.1} parent=1 // pred_check
      _
    $region27: #{tpu_custom_call.1} parent=1 // pred_check_branch
      %155 = sbr.rel (0) target = $region29
    $region28: #{tpu_custom_call.1} parent=1 // pred_region
      _
    $region29: #{tpu_custom_call.1} parent=1 // pred_fallthru
      _
    %156 = vsyncpa [#allocation3], 1
    %157 = vsyncpa [#allocation5], 1

</llo_original>
